<compile_context>
chip_gen: v7x
topology: tpu7x:2x2x1
jax: 0.10.0
libtpu: 0.0.40
codegen_flags: <defaults>
</compile_context>

<pallas_src>
import functools

import jax
import jax.numpy as jnp
from jax.experimental import pallas as pl
from jax.experimental.pallas import tpu as pltpu


def _custom_loss_kernel(pred_ref, c_ref, tgt_ref, out_ref, *, r, b_actual, tile_b):
    """One batch tile: partial sum of the hinge loss, written lane-dense."""
    eps = 1e-6  # PyTorch PairwiseDistance adds eps to the difference before the norm.

    pred = pred_ref[...].astype(jnp.float32)              # [TILE_B, D]
    c = c_ref[...].astype(jnp.float32)                    # [1, D]  (broadcast over rows)
    diff = pred - c + eps
    dist = jnp.sqrt(jnp.sum(diff * diff, axis=-1, keepdims=True))   # [TILE_B, 1]

    t = tgt_ref[...].astype(jnp.float32)                  # [TILE_B, 1]
    pos = t * jnp.maximum(dist - r, 0.0)                  # positives penalized outside sphere
    neg = (1.0 - t) * jnp.maximum(r - dist, 0.0)          # negatives penalized inside sphere
    vals = pos * pos + neg * neg                          # [TILE_B, 1]

    # Mask out batch-padding rows (B was rounded up to a multiple of TILE_B).
    row = pl.program_id(0) * tile_b + jax.lax.broadcasted_iota(jnp.int32, vals.shape, 0)
    vals = jnp.where(row < b_actual, vals, 0.0)

    partial = jnp.sum(vals)
    # Lane-dense full-width store; the wrapper reads lane 0 of each tile.
    out_ref[...] = jnp.full(out_ref.shape, partial, dtype=jnp.float32)


def _choose_tile_b(b, d):
    """Batch tile: multiple of 8, keeps the double-buffered predictions tile at
    ~<= 8 MiB of lane-padded VMEM (safe on v5e's 16 MiB scoped default and on
    v7x's 64 MiB physical VMEM), and at least ~4 MiB per block when B allows,
    to amortize the ~0.35 us per-grid-step overhead."""
    d_lanes = ((d + 127) // 128) * 128           # VMEM lane padding of the last dim
    bytes_per_row = d_lanes * 4                  # f32 after in-kernel cast
    target_block_bytes = 4 * 1024 * 1024         # per input buffer (x2 for double buffering)
    tile = max(8, (target_block_bytes // bytes_per_row) // 8 * 8)
    b_pad8 = ((b + 7) // 8) * 8
    return min(tile, b_pad8)


def custom_loss(predictions, targets, c, r, *, tile_b=None):
    """predictions: [B, D] (any float dtype), targets: [B] (0/1), c: [D], r: python float."""
    B, D = predictions.shape
    tile_b = tile_b if tile_b is not None else _choose_tile_b(B, D)
    num_tiles = pl.cdiv(B, tile_b)
    b_padded = num_tiles * tile_b

    if b_padded != B:
        predictions = jnp.pad(predictions, ((0, b_padded - B), (0, 0)))
        targets = jnp.pad(targets, ((0, b_padded - B),))

    c2 = c.reshape(1, D).astype(jnp.float32)      # tiny; fine to cast in the wrapper
    t2 = targets.reshape(b_padded, 1)             # native dtype; cast in-kernel

    kernel = functools.partial(_custom_loss_kernel, r=float(r), b_actual=B, tile_b=tile_b)
    partials = pl.pallas_call(
        kernel,
        out_shape=jax.ShapeDtypeStruct((num_tiles, 1, 128), jnp.float32),
        grid=(num_tiles,),
        in_specs=[
            pl.BlockSpec((tile_b, D), lambda i: (i, 0)),   # predictions tile
            pl.BlockSpec((1, D), lambda i: (0, 0)),        # center (same block every step)
            pl.BlockSpec((tile_b, 1), lambda i: (i, 0)),   # targets tile
        ],
        out_specs=pl.BlockSpec((1, 1, 128), lambda i: (i, 0, 0)),
        compiler_params=pltpu.CompilerParams(
            dimension_semantics=("parallel",),
        ),
    )(predictions, c2, t2)

    # Per-tile partial sums -> mean over the true batch size (not the padded one).
    return jnp.sum(partials[:, 0, 0]) / B


def custom_loss_ref(predictions, targets, c, r):
    """Pure-JAX reference mirroring the PyTorch forward."""
    p = predictions.astype(jnp.float32)
    t = targets.astype(jnp.float32)
    d = jnp.sqrt(jnp.sum((p - c[None, :].astype(jnp.float32) + 1e-6) ** 2, axis=-1))
    return jnp.mean(
        (t * jnp.maximum(0.0, d - r)) ** 2
        + ((1.0 - t) * jnp.maximum(0.0, r - d)) ** 2
    )


if __name__ == "__main__":
    key = jax.random.PRNGKey(0)
    k_pred, k_tgt, k_c, k_pred2, k_tgt2 = jax.random.split(key, 5)

    # Small shapes consistent with the module's [batch, feature] predictions.
    B, D = 8, 32
    predictions = jax.random.normal(k_pred, (B, D), dtype=jnp.float32)
    targets = (jax.random.uniform(k_tgt, (B,)) > 0.5).astype(jnp.float32)
    c = jax.random.normal(k_c, (D,), dtype=jnp.float32)   # module "parameters" (center, radius)
    r = 0.5

    loss = custom_loss(predictions, targets, c, r)
    jax.block_until_ready(loss)
    ref = custom_loss_ref(predictions, targets, c, r)
    assert jnp.allclose(loss, ref, rtol=1e-5, atol=1e-6), (loss, ref)

    # Second check: multi-tile grid with a batch remainder (exercises the
    # parallel grid, per-tile partial sums, and the padded-row mask).
    B2, D2 = 1000, 64
    predictions2 = jax.random.normal(k_pred2, (B2, D2), dtype=jnp.float32)
    targets2 = (jax.random.uniform(k_tgt2, (B2,)) > 0.5).astype(jnp.float32)
    c2 = jax.random.normal(k_c, (D2,), dtype=jnp.float32)
    loss2 = custom_loss(predictions2, targets2, c2, r, tile_b=128)
    jax.block_until_ready(loss2)
    ref2 = custom_loss_ref(predictions2, targets2, c2, r)
    assert jnp.allclose(loss2, ref2, rtol=1e-5, atol=1e-5), (loss2, ref2)

    print("KERNEL_OK")
</pallas_src>

<mosaic_0001>
module attributes {stable_mosaic.version = 11 : i64} {
  func.func @_custom_loss_kernel(%arg0: i32, %arg1: memref<8x32xf32, #tpu.memory_space<vmem>>, %arg2: memref<1x32xf32, #tpu.memory_space<vmem>>, %arg3: memref<8x1xf32, #tpu.memory_space<vmem>>, %arg4: memref<1x1x128xf32, #tpu.memory_space<vmem>>) attributes {dimension_semantics = [#tpu.dimension_semantics<parallel>], iteration_bounds = array<i64: 1>, scalar_prefetch = 0 : i64, scratch_operands = 0 : i64, tpu.core_type = #tpu.core_type<tc>, window_params = [{transform_indices = @transform_0, window_bounds = array<i64: 8, 32>}, {pipeline_mode = #tpu.pipeline_mode<synchronous>, transform_indices = @transform_1, window_bounds = array<i64: 1, 32>}, {transform_indices = @transform_2, window_bounds = array<i64: 8, 1>}, {transform_indices = @transform_3, window_bounds = array<i64: 1, 1, 128>}]} {
    %c0 = arith.constant 0 : index
    %c0_0 = arith.constant 0 : index
    %0 = vector.load %arg1[%c0, %c0_0] : memref<8x32xf32, #tpu.memory_space<vmem>>, vector<8x32xf32>
    %c0_1 = arith.constant 0 : index
    %c0_2 = arith.constant 0 : index
    %1 = vector.load %arg2[%c0_1, %c0_2] : memref<1x32xf32, #tpu.memory_space<vmem>>, vector<1x32xf32>
    %2 = vector.broadcast %1 : vector<1x32xf32> to vector<8x32xf32>
    %3 = arith.subf %0, %2 : vector<8x32xf32>
    %cst = arith.constant 9.99999997E-7 : f32
    %4 = vector.broadcast %cst : f32 to vector<8x32xf32>
    %5 = arith.addf %3, %4 : vector<8x32xf32>
    %6 = arith.mulf %5, %5 : vector<8x32xf32>
    %cst_3 = arith.constant dense<0.000000e+00> : vector<8xf32>
    %7 = vector.multi_reduction <add>, %6, %cst_3 [1] : vector<8x32xf32> to vector<8xf32>
    %8 = vector.shape_cast %7 : vector<8xf32> to vector<8x1xf32>
    %9 = math.sqrt %8 : vector<8x1xf32>
    %c0_4 = arith.constant 0 : index
    %c0_5 = arith.constant 0 : index
    %10 = vector.load %arg3[%c0_4, %c0_5] : memref<8x1xf32, #tpu.memory_space<vmem>>, vector<8x1xf32>
    %cst_6 = arith.constant 5.000000e-01 : f32
    %11 = vector.broadcast %cst_6 : f32 to vector<8x1xf32>
    %12 = arith.subf %9, %11 : vector<8x1xf32>
    %cst_7 = arith.constant 0.000000e+00 : f32
    %13 = vector.broadcast %cst_7 : f32 to vector<8x1xf32>
    %14 = arith.maximumf %12, %13 : vector<8x1xf32>
    %15 = arith.mulf %10, %14 : vector<8x1xf32>
    %cst_8 = arith.constant 1.000000e+00 : f32
    %16 = vector.broadcast %cst_8 : f32 to vector<8x1xf32>
    %17 = arith.subf %16, %10 : vector<8x1xf32>
    %cst_9 = arith.constant 5.000000e-01 : f32
    %18 = vector.broadcast %cst_9 : f32 to vector<8x1xf32>
    %19 = arith.subf %18, %9 : vector<8x1xf32>
    %cst_10 = arith.constant 0.000000e+00 : f32
    %20 = vector.broadcast %cst_10 : f32 to vector<8x1xf32>
    %21 = arith.maximumf %19, %20 : vector<8x1xf32>
    %22 = arith.mulf %17, %21 : vector<8x1xf32>
    %23 = arith.mulf %15, %15 : vector<8x1xf32>
    %24 = arith.mulf %22, %22 : vector<8x1xf32>
    %25 = arith.addf %23, %24 : vector<8x1xf32>
    %c8_i32 = arith.constant 8 : i32
    %26 = arith.muli %arg0, %c8_i32 : i32
    %27 = tpu.iota {dimensions = array<i32: 0>} : vector<8x1xi32>
    %28 = vector.broadcast %26 : i32 to vector<8x1xi32>
    %29 = arith.addi %28, %27 : vector<8x1xi32>
    %c8_i32_11 = arith.constant 8 : i32
    %30 = vector.broadcast %c8_i32_11 : i32 to vector<8x1xi32>
    %31 = arith.cmpi slt, %29, %30 : vector<8x1xi32>
    %cst_12 = arith.constant 0.000000e+00 : f32
    %32 = vector.broadcast %cst_12 : f32 to vector<8x1xf32>
    %33 = arith.select %31, %25, %32 : vector<8x1xi1>, vector<8x1xf32>
    %34 = vector.shape_cast %33 : vector<8x1xf32> to vector<1x8x1xf32>
    %cst_13 = arith.constant dense<0.000000e+00> : vector<1xf32>
    %35 = vector.multi_reduction <add>, %34, %cst_13 [1, 2] : vector<1x8x1xf32> to vector<1xf32>
    %36 = vector.shape_cast %35 : vector<1xf32> to vector<1x1x1xf32>
    %37 = vector.extract %36[0, 0, 0] : f32 from vector<1x1x1xf32>
    %38 = vector.broadcast %37 : f32 to vector<1x1x128xf32>
    %c0_14 = arith.constant 0 : index
    %c0_15 = arith.constant 0 : index
    %c0_16 = arith.constant 0 : index
    %39 = vector.load %arg4[%c0_14, %c0_15, %c0_16] : memref<1x1x128xf32, #tpu.memory_space<vmem>>, vector<1x1x128xf32>
    tpu.vector_store %arg4[%c0_14, %c0_15, %c0_16], %38 {strides = array<i32>} : memref<1x1x128xf32, #tpu.memory_space<vmem>>, vector<1x1x128xf32>,
    return
  }
  func.func @transform_0(%arg0: i32) -> (i32, i32) {
    %c0_i32 = arith.constant 0 : i32
    %c0_i32_0 = arith.constant 0 : i32
    return %arg0, %c0_i32 : i32, i32
  }
  func.func @transform_1(%arg0: i32) -> (i32, i32) {
    %c0_i32 = arith.constant 0 : i32
    %c0_i32_0 = arith.constant 0 : i32
    %c0_i32_1 = arith.constant 0 : i32
    return %c0_i32, %c0_i32_0 : i32, i32
  }
  func.func @transform_2(%arg0: i32) -> (i32, i32) {
    %c0_i32 = arith.constant 0 : i32
    %c0_i32_0 = arith.constant 0 : i32
    return %arg0, %c0_i32 : i32, i32
  }
  func.func @transform_3(%arg0: i32) -> (i32, i32, i32) {
    %c0_i32 = arith.constant 0 : i32
    %c0_i32_0 = arith.constant 0 : i32
    %c0_i32_1 = arith.constant 0 : i32
    return %arg0, %c0_i32, %c0_i32_0 : i32, i32, i32
  }
}

</mosaic_0001>

<llo_original>
// kernel: tpu_custom_call.1
$region0: #{tpu_custom_call.1}
  #allocation0 [shape = 'u32[]', space=smem, size = 0x4, offset = 0x4, fixed_abs, tag = 'smem constant byte address 0x4 - core index']
  #allocation1 [shape = 'u32[144,128]{1,0:T(1,128)}', space=vmem, size = 0x12000, scoped, tag = 'internal scratch']
  %s0 = inlined_call_operand.vmem [shape: f32[8,32], index: 0, kind: input, shape index: {}]
  %s1 = inlined_call_operand.vmem [shape: f32[1,32], index: 1, kind: input, shape index: {}]
  %s2 = inlined_call_operand.vmem [shape: f32[8,1], index: 2, kind: input, shape index: {}]
  %s3 = inlined_call_operand.hbm [shape: f32[1,1,128], index: 3, kind: output, shape index: {}]
  %s4 = sld [smem:[#allocation0]]
  $region22: #{tpu_custom_call.1} parent=0
    _
  %s6 = ssub.s32 1, %s4
  %s7 = scalar_select 0, %s6, %s4
  $region1: #{tpu_custom_call.1} parent=0
    #allocation2 [shape = 'u8[512]{0}', space=vmem, size = 0x400, scoped, tag = 'output window, operand 0, single buffered']
    #allocation3 [shape = 's32[1]{0}', space=sflag, size = 0x4, scoped, tag = 'scoped memory for tpu_custom_call.1']
    %8 = vsyncpa [#allocation3], 0
    // Predicated region
    $region2: #{tpu_custom_call.1} parent=1 // pred_check
      _
    $region3: #{tpu_custom_call.1} parent=1 // pred_check_branch
      %10 = sbr.rel (0) target = $region5
    $region4: #{tpu_custom_call.1} parent=1 // pred_region
      _
    $region5: #{tpu_custom_call.1} parent=1 // pred_fallthru
      _
    // Predicated region
    $region6: #{tpu_custom_call.1} parent=1 // pred_check
      _
    $region7: #{tpu_custom_call.1} parent=1 // pred_check_branch
      %12 = sbr.rel (0) target = $region9
    $region8: #{tpu_custom_call.1} parent=1 // pred_region
      _
    $region9: #{tpu_custom_call.1} parent=1 // pred_fallthru
      _
    // Predicated region
    $region10: #{tpu_custom_call.1} parent=1 // pred_check
      _
    $region11: #{tpu_custom_call.1} parent=1 // pred_check_branch
      %14 = sbr.rel (0) target = $region13
    $region12: #{tpu_custom_call.1} parent=1 // pred_region
      _
    $region13: #{tpu_custom_call.1} parent=1 // pred_fallthru
      _
    %v15 = vld [vmem:[%s0] sm:$0xff]
    %v16 = vld [vmem:[%s1] sm:$0x1]
    %v18 = vlaneseq
    %v19 = vshrl.u32 %v18, 7
    %v20 = vsub.s32 0, %v19
    %v21 = vrot.slane %v16, %v20
    %v23 = vsub.f32 %v15, %v21
    %v24 = vadd.f32 %v23, 1e-06
    %v25 = vmul.f32 %v24, %v24
    %vm26 = vcmask 261120
    %v27 = vsel %vm26, %v25, 0.0
    %28 = vadd.xlane.f32.xlu0 %v27
    %v29 = vpop.xlane.xlu0 %28
    %v30 = vrsqrt.pop %v29
    %v31 = vmul.f32 %v29, %v30
    %vm32 = vcmp.eq.f32.partialorder %v29, inf
    %v33 = vsel %vm32, %v29, %v31
    %vm34 = vcmp.eq.f32.partialorder %v29, 0.0
    %v35 = vand.u32 %v29, 2147483648
    %v36 = vsel %vm34, %v35, %v33
    %v37 = vld [vmem:[%s2] sm:$0xff]
    %v38 = vsub.f32 %v36, 0.5
    %v39 = vmax.f32 %v38, 0.0
    %v40 = vmul.f32 %v37, %v39
    %v41 = vsub.f32 1.0, %v37
    %v42 = vsub.f32 0.5, %v36
    %v43 = vmax.f32 %v42, 0.0
    %v44 = vmul.f32 %v41, %v43
    %v45 = vmul.f32 %v40, %v40
    %v46 = vmul.f32 %v44, %v44
    %v47 = vadd.f32 %v45, %v46
    %s48 = smul.u32 0, 8
    %v49 = vlaneseq
    %v50 = vshrl.u32 %v49, 7
    %v51 = vstv %s48
    %v52 = vadd.s32 %v51, %v50
    %vm53 = vcmp.lt.s32.totalorder %v52, 8
    %v54 = vsel %vm53, %v47, 0.0
    %vm55 = vcmask 7168
    %v56 = vsel %vm55, %v54, 0.0
    %57 = vadd.xlane.f32.xlu0 %v56
    %v58 = vpop.xlane.xlu0 %57
    %v59 = vrot.slane %v58, 4
    %v60 = vadd.f32 %v58, %v59
    %v61 = vrot.slane %v60, 2
    %v62 = vadd.f32 %v60, %v61
    %v63 = vrot.slane %v62, 1
    %v64 = vadd.f32 %v62, %v63
    %s65 = vtos %v64
    %v66 = vstv %s65
    %67 = vst [vmem:[#allocation2] sm:$0x1] %v66
    // Predicated region
    $region14: #{tpu_custom_call.1} parent=1 // pred_check
      _
    $region15: #{tpu_custom_call.1} parent=1 // pred_check_branch
      %69 = sbr.rel (0) target = $region17
    $region16: #{tpu_custom_call.1} parent=1 // pred_region
      %s71 = ssub.s32 16, 16
      %72 = vsyncadd [#allocation3], %s71
      %s74 = sshll.u32 [#allocation2], 4
      %s75 = int_to_ptr.vmem [resolvable:$true] %s74
      %77 = dma.vmem_to_hbm [thread:$0]  %s75, 16, %s3, [#allocation3]
    $region17: #{tpu_custom_call.1} parent=1 // pred_fallthru
      _
    // Predicated region
    $region18: #{tpu_custom_call.1} parent=1 // pred_check
      _
    $region19: #{tpu_custom_call.1} parent=1 // pred_check_branch
      %79 = sbr.rel (0) target = $region21
    $region20: #{tpu_custom_call.1} parent=1 // pred_region
      %80 = dma.done [#allocation3], 16
    $region21: #{tpu_custom_call.1} parent=1 // pred_fallthru
      _
    %81 = vsyncpa [#allocation3], 1

</llo_original>
